<compile_context>
chip_gen: v7x
topology: tpu7x:2x2x1
jax: 0.10.0
libtpu: 0.0.40
codegen_flags: <defaults>
</compile_context>

<pallas_src>
import functools

import jax
import jax.numpy as jnp
from jax.experimental import pallas as pl
from jax.experimental.pallas import tpu as pltpu

_LANES = 128      # vreg lane width (fast axis)
_SUBLANES = 8     # f32 sublane granule
_GRANULE = _LANES * _SUBLANES  # 1024 elements == one (8, 128) f32 tile


def _scale_bias_kernel(x_ref, w_ref, b_ref, o_ref):
    # x_ref / o_ref: (TILE_ROWS, 128) VMEM tiles.
    # w_ref / b_ref: (1, 1) SMEM scalars.
    w = w_ref[0, 0]
    b = b_ref[0, 0]
    o_ref[...] = x_ref[...] * w + b  # single VPU fma per vreg


def _round_up(v, m):
    return ((v + m - 1) // m) * m


@functools.partial(jax.jit, static_argnames=("max_tile_rows",))
def linear_forward(x, w, b, *, max_tile_rows=2048):
    """nn.Linear(1, 1) forward. x: (B, 1) f32, w: (1, 1) f32, b: (1,) f32 -> (B, 1) f32."""
    B, in_features = x.shape
    out_features, in_features_w = w.shape
    assert in_features == 1 and out_features == 1 and in_features_w == 1

    n = B  # total scalar elements
    flat = x.reshape(n)  # contiguous -> free reshape, no copy

    # Lane-dense slab.  Pad only to the (8, 128) granule; the ragged last grid
    # block (when padded_rows % tile_rows != 0) is masked by Pallas itself.
    rows = pl.cdiv(n, _LANES)
    padded_rows = _round_up(max(rows, _SUBLANES), _SUBLANES)
    padded_n = padded_rows * _LANES

    needs_pad = padded_n != n
    if needs_pad:
        flat = jnp.pad(flat, (0, padded_n - n))
    slab = flat.reshape(padded_rows, _LANES)  # free when no pad was needed

    # Tile selection: as large as max_tile_rows to amortize per-step overhead,
    # but capped so there are >= 2 grid steps when possible (keeps both v7x
    # TensorCores busy for mid-size batches).
    half_rows = _round_up(pl.cdiv(padded_rows, 2), _SUBLANES)
    tile_rows = max(_SUBLANES, min(max_tile_rows, half_rows))
    num_tiles = pl.cdiv(padded_rows, tile_rows)

    w_smem = w.reshape(1, 1).astype(x.dtype)
    b_smem = b.reshape(1, 1).astype(x.dtype)

    itemsize = jnp.dtype(x.dtype).itemsize
    cost = pl.CostEstimate(
        flops=2 * padded_n,                      # one mul + one add per element
        transcendentals=0,
        bytes_accessed=2 * padded_n * itemsize,  # read + write
    )

    out_slab = pl.pallas_call(
        _scale_bias_kernel,
        out_shape=jax.ShapeDtypeStruct((padded_rows, _LANES), x.dtype),
        grid_spec=pltpu.PrefetchScalarGridSpec(
            num_scalar_prefetch=0,
            grid=(num_tiles,),
            in_specs=[
                pl.BlockSpec((tile_rows, _LANES), lambda i: (i, 0)),
                pl.BlockSpec(memory_space=pltpu.MemorySpace.SMEM),
                pl.BlockSpec(memory_space=pltpu.MemorySpace.SMEM),
            ],
            out_specs=pl.BlockSpec((tile_rows, _LANES), lambda i: (i, 0)),
        ),
        compiler_params=pltpu.CompilerParams(
            dimension_semantics=("parallel",),
            vmem_limit_bytes=32 << 20,  # explicit: safe headroom on v5e/v6e/v7x
        ),
        cost_estimate=cost,
    )(slab, w_smem, b_smem)

    out_flat = out_slab.reshape(padded_n)
    if needs_pad:
        out_flat = out_flat[:n]  # only in the ragged-B path
    return out_flat.reshape(B, out_features)


if __name__ == "__main__":
    key = jax.random.PRNGKey(0)
    kx, kw, kb = jax.random.split(key, 3)

    IN, OUT = 1, 1
    # Deterministic parameter init (PyTorch default: U(-1/sqrt(in), 1/sqrt(in)) = U(-1, 1)).
    w = jax.random.uniform(kw, (OUT, IN), dtype=jnp.float32, minval=-1.0, maxval=1.0)
    b = jax.random.uniform(kb, (OUT,), dtype=jnp.float32, minval=-1.0, maxval=1.0)

    # Small ragged batch (exercises the granule-padded path), spec-consistent x: (B, 1).
    B = 8
    x = jax.random.normal(kx, (B, IN), dtype=jnp.float32)
    y = jax.block_until_ready(linear_forward(x, w, b))
    y_ref = x @ w.T + b
    assert y.shape == (B, OUT)
    assert jnp.allclose(y, y_ref, atol=1e-5, rtol=1e-5)

    # Granule-aligned batch (exercises the zero-copy fast path: no pad, no trim).
    B2 = 2048
    x2 = jax.random.normal(kx, (B2, IN), dtype=jnp.float32)
    y2 = jax.block_until_ready(linear_forward(x2, w, b))
    y2_ref = x2 @ w.T + b
    assert y2.shape == (B2, OUT)
    assert jnp.allclose(y2, y2_ref, atol=1e-5, rtol=1e-5)

    print("KERNEL_OK")
</pallas_src>

<mosaic_0001>
module attributes {stable_mosaic.version = 11 : i64} {
  func.func @_scale_bias_kernel(%arg0: i32, %arg1: memref<8x128xf32, #tpu.memory_space<vmem>>, %arg2: memref<1x1xf32, #tpu.memory_space<smem>>, %arg3: memref<1x1xf32, #tpu.memory_space<smem>>, %arg4: memref<8x128xf32, #tpu.memory_space<vmem>>) attributes {dimension_semantics = [#tpu.dimension_semantics<parallel>], iteration_bounds = array<i64: 1>, scalar_prefetch = 0 : i64, scratch_operands = 0 : i64, tpu.core_type = #tpu.core_type<tc>, window_params = [{transform_indices = @transform_0, window_bounds = array<i64: 8, 128>}, {transform_indices = @transform_1, window_bounds = array<i64: 1, 1>}, {transform_indices = @transform_2, window_bounds = array<i64: 1, 1>}, {transform_indices = @transform_3, window_bounds = array<i64: 8, 128>}]} {
    %c0 = arith.constant 0 : index
    %c0_0 = arith.constant 0 : index
    %0 = memref.load %arg2[%c0, %c0_0] : memref<1x1xf32, #tpu.memory_space<smem>>
    %c0_1 = arith.constant 0 : index
    %c0_2 = arith.constant 0 : index
    %1 = memref.load %arg3[%c0_1, %c0_2] : memref<1x1xf32, #tpu.memory_space<smem>>
    %c0_3 = arith.constant 0 : index
    %c0_4 = arith.constant 0 : index
    %2 = vector.load %arg1[%c0_3, %c0_4] : memref<8x128xf32, #tpu.memory_space<vmem>>, vector<8x128xf32>
    %3 = vector.broadcast %0 : f32 to vector<8x128xf32>
    %4 = arith.mulf %2, %3 : vector<8x128xf32>
    %5 = vector.broadcast %1 : f32 to vector<8x128xf32>
    %6 = arith.addf %4, %5 : vector<8x128xf32>
    %c0_5 = arith.constant 0 : index
    %c0_6 = arith.constant 0 : index
    %7 = vector.load %arg4[%c0_5, %c0_6] : memref<8x128xf32, #tpu.memory_space<vmem>>, vector<8x128xf32>
    tpu.vector_store %arg4[%c0_5, %c0_6], %6 {strides = array<i32>} : memref<8x128xf32, #tpu.memory_space<vmem>>, vector<8x128xf32>,
    return
  }
  func.func @transform_0(%arg0: i32) -> (i32, i32) {
    %c0_i32 = arith.constant 0 : i32
    %c0_i32_0 = arith.constant 0 : i32
    return %arg0, %c0_i32 : i32, i32
  }
  func.func @transform_1(%arg0: i32) -> (i32, i32) {
    %c0_i32 = arith.constant 0 : i32
    %c0_i32_0 = arith.constant 0 : i32
    %c0_i32_1 = arith.constant 0 : i32
    return %c0_i32, %c0_i32_0 : i32, i32
  }
  func.func @transform_2(%arg0: i32) -> (i32, i32) {
    %c0_i32 = arith.constant 0 : i32
    %c0_i32_0 = arith.constant 0 : i32
    %c0_i32_1 = arith.constant 0 : i32
    return %c0_i32, %c0_i32_0 : i32, i32
  }
  func.func @transform_3(%arg0: i32) -> (i32, i32) {
    %c0_i32 = arith.constant 0 : i32
    %c0_i32_0 = arith.constant 0 : i32
    return %arg0, %c0_i32 : i32, i32
  }
}

</mosaic_0001>

<llo_original>
// kernel: linear_forward.1
$region0: #{linear_forward.1}
  #allocation0 [shape = 'u32[]', space=smem, size = 0x4, offset = 0x4, fixed_abs, tag = 'smem constant byte address 0x4 - core index']
  #allocation1 [shape = 'u32[144,128]{1,0:T(1,128)}', space=vmem, size = 0x12000, scoped, tag = 'internal scratch']
  #allocation2 [shape = 'f32[1,1]{1,0:T(1,128)S(6)}', space=smem, size = 0x200, scoped, tag = 'scoped memory for linear_forward.1']
  #allocation3 [shape = 'f32[1,1]{1,0:T(1,128)S(6)}', space=smem, size = 0x200, scoped, tag = 'scoped memory for linear_forward.1']
  %s0 = inlined_call_operand.vmem [shape: f32[8,128], index: 0, kind: input, shape index: {}]
  %s1 = inlined_call_operand.<no memory space> [shape: f32[1,1], index: 1, kind: input, shape index: {}]
  %s2 = inlined_call_operand.<no memory space> [shape: f32[1,1], index: 2, kind: input, shape index: {}]
  %s3 = inlined_call_operand.vmem [shape: f32[8,128], index: 3, kind: output, shape index: {}]
  %s4 = sld [smem:[#allocation0]]
  $region22: #{linear_forward.1} parent=0
    _
  %s6 = ssub.s32 1, %s4
  %s7 = scalar_select 0, %s6, %s4
  %8 = sst [smem:[#allocation2]] %s1
  %9 = sst [smem:[#allocation3]] %s2
  // Predicated region
  $region2: #{linear_forward.1} parent=0 // pred_check
    _
  $region3: #{linear_forward.1} parent=0 // pred_check_branch
    %11 = sbr.rel (0) target = $region5
  $region4: #{linear_forward.1} parent=0 // pred_region
    _
  $region5: #{linear_forward.1} parent=0 // pred_fallthru
    _
  // Predicated region
  $region6: #{linear_forward.1} parent=0 // pred_check
    _
  $region7: #{linear_forward.1} parent=0 // pred_check_branch
    %13 = sbr.rel (0) target = $region9
  $region8: #{linear_forward.1} parent=0 // pred_region
    _
  $region9: #{linear_forward.1} parent=0 // pred_fallthru
    _
  // Predicated region
  $region10: #{linear_forward.1} parent=0 // pred_check
    _
  $region11: #{linear_forward.1} parent=0 // pred_check_branch
    %15 = sbr.rel (0) target = $region13
  $region12: #{linear_forward.1} parent=0 // pred_region
    _
  $region13: #{linear_forward.1} parent=0 // pred_fallthru
    _
  %s16 = sld [smem:[#allocation2]]
  %s17 = sld [smem:[#allocation3]]
  %v18 = vld [vmem:[%s0] sm:$0xff]
  %v19 = vstv %s16
  %v20 = vmul.f32 %v18, %v19
  %v21 = vstv %s17
  %v22 = vadd.f32 %v20, %v21
  %23 = vst [vmem:[%s3] sm:$0xff] %v22
  // Predicated region
  $region14: #{linear_forward.1} parent=0 // pred_check
    _
  $region15: #{linear_forward.1} parent=0 // pred_check_branch
    %25 = sbr.rel (0) target = $region17
  $region16: #{linear_forward.1} parent=0 // pred_region
    _
  $region17: #{linear_forward.1} parent=0 // pred_fallthru
    _
  // Predicated region
  $region18: #{linear_forward.1} parent=0 // pred_check
    _
  $region19: #{linear_forward.1} parent=0 // pred_check_branch
    %27 = sbr.rel (0) target = $region21
  $region20: #{linear_forward.1} parent=0 // pred_region
    _
  $region21: #{linear_forward.1} parent=0 // pred_fallthru
    _

</llo_original>
